<compile_context>
chip_gen: v6e
topology: v6e:2x2x1
jax: 0.10.0
libtpu: 0.0.40
codegen_flags: <defaults>
</compile_context>

<pallas_src>
import functools

import jax
import jax.numpy as jnp
from jax.experimental import pallas as pl
from jax.experimental.pallas import tpu as pltpu

LANE = 128
SUBLANE = 8


def _segloss_kernel(x_ref, y_ref, out_ref, *, total_rows, tm, num_blocks,
                    blocks_per_core):
    c = pl.program_id(0)            # core (parallel) index
    i = pl.program_id(1)            # row-block (reduction) index
    gb = c * blocks_per_core + i    # global, unclamped row-block index

    @pl.when(i == 0)
    def _():
        out_ref[...] = jnp.zeros_like(out_ref)

    x = x_ref[...]                  # (tm, 128) f32 logits
    y = y_ref[...]                  # (tm, 128) f32 targets

    # Numerically stable BCE-with-logits (same formula PyTorch uses):
    #   loss = max(x, 0) - x*y + log(1 + exp(-|x|))
    loss = jnp.maximum(x, 0.0) - x * y + jnp.log1p(jnp.exp(-jnp.abs(x)))

    def fold(t):  # (tm, 128) -> (8, 128) partial sums; pure VALU adds
        return jnp.sum(t.reshape(tm // SUBLANE, SUBLANE, LANE), axis=0)

    # Interior blocks: unmasked accumulate (the hot path).
    @pl.when(gb < num_blocks - 1)
    def _():
        out_ref[...] += fold(loss)

    # Edge blocks only: ragged last block (rows beyond the array are garbage)
    # or the clamped duplicate block on the second core when num_blocks is odd.
    @pl.when(gb >= num_blocks - 1)
    def _():
        row = gb * tm + jax.lax.broadcasted_iota(jnp.int32, (tm, LANE), 0)
        out_ref[...] += fold(jnp.where(row < total_rows, loss, 0.0))


def seg_loss(pred_bev, bev, *, tm_max=1024, n_cores=2):
    """BCEWithLogitsLoss(reduction='none')(pred_bev, bev).mean() on TPU."""
    assert pred_bev.shape == bev.shape
    n = int(pred_bev.size)

    x = pred_bev.reshape(-1).astype(jnp.float32)
    y = bev.reshape(-1).astype(jnp.float32)

    # Value-pad the (< 1024-element) ragged tail so pad elements contribute
    # exactly 0 loss: max(-1e4,0)=0, (-1e4)*0=0, log1p(exp(-1e4))=0.
    pad = (-n) % (SUBLANE * LANE)
    if pad:
        # TODO(synk): for huge lane-unaligned inputs this still copies the flat
        # array once; a manual-DMA (pl.ANY) tail handler would avoid it.
        x = jnp.pad(x, (0, pad), constant_values=-1e4)
        y = jnp.pad(y, (0, pad), constant_values=0.0)

    rows = (n + pad) // LANE                 # multiple of 8
    x2 = x.reshape(rows, LANE)
    y2 = y.reshape(rows, LANE)

    tm = min(tm_max, rows)                   # multiple of 8, <= rows
    num_blocks = -(-rows // tm)
    blocks_per_core = -(-num_blocks // n_cores)

    kernel = functools.partial(
        _segloss_kernel, total_rows=rows, tm=tm,
        num_blocks=num_blocks, blocks_per_core=blocks_per_core)

    def in_map(c, i):
        # Clamp so a possible extra trailing iteration on the last core just
        # re-reads the final block; its contribution is masked to 0 in-kernel.
        return (jnp.minimum(c * blocks_per_core + i, num_blocks - 1), 0)

    partials = pl.pallas_call(
        kernel,
        out_shape=jax.ShapeDtypeStruct((n_cores * SUBLANE, LANE), jnp.float32),
        grid_spec=pltpu.PrefetchScalarGridSpec(
            num_scalar_prefetch=0,
            grid=(n_cores, blocks_per_core),
            in_specs=[
                pl.BlockSpec((tm, LANE), in_map),
                pl.BlockSpec((tm, LANE), in_map),
            ],
            out_specs=pl.BlockSpec((SUBLANE, LANE), lambda c, i: (c, 0)),
        ),
        compiler_params=pltpu.CompilerParams(
            dimension_semantics=("parallel", "arbitrary")
        ),
    )(x2, y2)

    # Tiny final reduce of the (n_cores*8, 128) partial-sum slab + mean scale.
    return jnp.sum(partials) / jnp.float32(n)


def _seg_loss_ref(pred_bev, bev):
    x = pred_bev.astype(jnp.float32)
    y = bev.astype(jnp.float32)
    loss = jnp.maximum(x, 0.0) - x * y + jnp.log1p(jnp.exp(-jnp.abs(x)))
    return jnp.mean(loss)


if __name__ == "__main__":
    key = jax.random.PRNGKey(0)
    k1, k2 = jax.random.split(key)

    # pred_bev: logits; bev: binary-ish target map.  NCHW, small shapes.
    pred_bev = jax.random.normal(k1, (2, 4, 16, 16), dtype=jnp.float32)
    bev = jax.random.bernoulli(k2, p=0.3, shape=(2, 4, 16, 16)).astype(jnp.float32)

    out = seg_loss(pred_bev, bev)
    out = jax.block_until_ready(out)

    ref = jax.block_until_ready(_seg_loss_ref(pred_bev, bev))
    assert jnp.allclose(out, ref, rtol=1e-5, atol=1e-5), (out, ref)

    print("KERNEL_OK")
</pallas_src>

<mosaic_0001>
module attributes {stable_mosaic.version = 11 : i64} {
  func.func @_segloss_kernel(%arg0: i32, %arg1: i32, %arg2: memref<16x128xf32, #tpu.memory_space<vmem>>, %arg3: memref<16x128xf32, #tpu.memory_space<vmem>>, %arg4: memref<8x128xf32, #tpu.memory_space<vmem>>) attributes {dimension_semantics = [#tpu.dimension_semantics<parallel>, #tpu.dimension_semantics<arbitrary>], iteration_bounds = array<i64: 2, 1>, scalar_prefetch = 0 : i64, scratch_operands = 0 : i64, tpu.core_type = #tpu.core_type<tc>, window_params = [{transform_indices = @transform_0, window_bounds = array<i64: 16, 128>}, {transform_indices = @transform_1, window_bounds = array<i64: 16, 128>}, {transform_indices = @transform_2, window_bounds = array<i64: 8, 128>}]} {
    %c1_i32 = arith.constant 1 : i32
    %0 = arith.muli %arg0, %c1_i32 : i32
    %1 = arith.addi %0, %arg1 : i32
    %c0_i32 = arith.constant 0 : i32
    %2 = arith.cmpi eq, %arg1, %c0_i32 : i32
    %3 = arith.extui %2 : i1 to i32
    %c0_i32_0 = arith.constant 0 : i32
    %4 = arith.cmpi ne, %3, %c0_i32_0 : i32
    scf.if %4 {
      %cst_9 = arith.constant 0.000000e+00 : f32
      %23 = vector.broadcast %cst_9 : f32 to vector<8x128xf32>
      %c0_10 = arith.constant 0 : index
      %c0_11 = arith.constant 0 : index
      %24 = vector.load %arg4[%c0_10, %c0_11] : memref<8x128xf32, #tpu.memory_space<vmem>>, vector<8x128xf32>
      tpu.vector_store %arg4[%c0_10, %c0_11], %23 {strides = array<i32>} : memref<8x128xf32, #tpu.memory_space<vmem>>, vector<8x128xf32>,
    } else {
    }
    %c0 = arith.constant 0 : index
    %c0_1 = arith.constant 0 : index
    %5 = vector.load %arg2[%c0, %c0_1] : memref<16x128xf32, #tpu.memory_space<vmem>>, vector<16x128xf32>
    %c0_2 = arith.constant 0 : index
    %c0_3 = arith.constant 0 : index
    %6 = vector.load %arg3[%c0_2, %c0_3] : memref<16x128xf32, #tpu.memory_space<vmem>>, vector<16x128xf32>
    %cst = arith.constant 0.000000e+00 : f32
    %7 = vector.broadcast %cst : f32 to vector<16x128xf32>
    %8 = arith.maximumf %5, %7 : vector<16x128xf32>
    %9 = arith.mulf %5, %6 : vector<16x128xf32>
    %10 = arith.subf %8, %9 : vector<16x128xf32>
    %11 = math.absf %5 : vector<16x128xf32>
    %cst_4 = arith.constant 0.000000e+00 : f32
    %12 = vector.broadcast %cst_4 : f32 to vector<16x128xf32>
    %13 = arith.subf %12, %11 : vector<16x128xf32>
    %14 = math.exp %13 : vector<16x128xf32>
    %15 = math.log1p %14 : vector<16x128xf32>
    %16 = arith.addf %10, %15 : vector<16x128xf32>
    %c0_i32_5 = arith.constant 0 : i32
    %17 = arith.cmpi slt, %1, %c0_i32_5 : i32
    %18 = arith.extui %17 : i1 to i32
    %c0_i32_6 = arith.constant 0 : i32
    %19 = arith.cmpi ne, %18, %c0_i32_6 : i32
    scf.if %19 {
      %c0_9 = arith.constant 0 : index
      %c0_10 = arith.constant 0 : index
      %23 = vector.load %arg4[%c0_9, %c0_10] : memref<8x128xf32, #tpu.memory_space<vmem>>, vector<8x128xf32>
      %24 = vector.shape_cast %16 : vector<16x128xf32> to vector<2x8x128xf32>
      %cst_11 = arith.constant dense<0.000000e+00> : vector<8x128xf32>
      %25 = vector.multi_reduction <add>, %24, %cst_11 [0] : vector<2x8x128xf32> to vector<8x128xf32>
      %26 = arith.addf %23, %25 : vector<8x128xf32>
      %c0_12 = arith.constant 0 : index
      %c0_13 = arith.constant 0 : index
      %27 = vector.load %arg4[%c0_12, %c0_13] : memref<8x128xf32, #tpu.memory_space<vmem>>, vector<8x128xf32>
      tpu.vector_store %arg4[%c0_12, %c0_13], %26 {strides = array<i32>} : memref<8x128xf32, #tpu.memory_space<vmem>>, vector<8x128xf32>,
    } else {
    }
    %c0_i32_7 = arith.constant 0 : i32
    %20 = arith.cmpi sge, %1, %c0_i32_7 : i32
    %21 = arith.extui %20 : i1 to i32
    %c0_i32_8 = arith.constant 0 : i32
    %22 = arith.cmpi ne, %21, %c0_i32_8 : i32
    scf.if %22 {
      %c16_i32 = arith.constant 16 : i32
      %23 = arith.muli %1, %c16_i32 : i32
      %24 = tpu.iota {dimensions = array<i32: 0>} : vector<16x128xi32>
      %25 = vector.broadcast %23 : i32 to vector<16x128xi32>
      %26 = arith.addi %25, %24 : vector<16x128xi32>
      %c0_9 = arith.constant 0 : index
      %c0_10 = arith.constant 0 : index
      %27 = vector.load %arg4[%c0_9, %c0_10] : memref<8x128xf32, #tpu.memory_space<vmem>>, vector<8x128xf32>
      %c16_i32_11 = arith.constant 16 : i32
      %28 = vector.broadcast %c16_i32_11 : i32 to vector<16x128xi32>
      %29 = arith.cmpi slt, %26, %28 : vector<16x128xi32>
      %cst_12 = arith.constant 0.000000e+00 : f32
      %30 = vector.broadcast %cst_12 : f32 to vector<16x128xf32>
      %31 = arith.select %29, %16, %30 : vector<16x128xi1>, vector<16x128xf32>
      %32 = vector.shape_cast %31 : vector<16x128xf32> to vector<2x8x128xf32>
      %cst_13 = arith.constant dense<0.000000e+00> : vector<8x128xf32>
      %33 = vector.multi_reduction <add>, %32, %cst_13 [0] : vector<2x8x128xf32> to vector<8x128xf32>
      %34 = arith.addf %27, %33 : vector<8x128xf32>
      %c0_14 = arith.constant 0 : index
      %c0_15 = arith.constant 0 : index
      %35 = vector.load %arg4[%c0_14, %c0_15] : memref<8x128xf32, #tpu.memory_space<vmem>>, vector<8x128xf32>
      tpu.vector_store %arg4[%c0_14, %c0_15], %34 {strides = array<i32>} : memref<8x128xf32, #tpu.memory_space<vmem>>, vector<8x128xf32>,
    } else {
    }
    return
  }
  func.func @transform_0(%arg0: i32, %arg1: i32) -> (i32, i32) {
    %c1_i32 = arith.constant 1 : i32
    %0 = arith.muli %arg0, %c1_i32 : i32
    %1 = arith.addi %0, %arg1 : i32
    %c0_i32 = arith.constant 0 : i32
    %2 = arith.minsi %1, %c0_i32 : i32
    %c0_i32_0 = arith.constant 0 : i32
    %c0_i32_1 = arith.constant 0 : i32
    return %2, %c0_i32_0 : i32, i32
  }
  func.func @transform_1(%arg0: i32, %arg1: i32) -> (i32, i32) {
    %c1_i32 = arith.constant 1 : i32
    %0 = arith.muli %arg0, %c1_i32 : i32
    %1 = arith.addi %0, %arg1 : i32
    %c0_i32 = arith.constant 0 : i32
    %2 = arith.minsi %1, %c0_i32 : i32
    %c0_i32_0 = arith.constant 0 : i32
    %c0_i32_1 = arith.constant 0 : i32
    return %2, %c0_i32_0 : i32, i32
  }
  func.func @transform_2(%arg0: i32, %arg1: i32) -> (i32, i32) {
    %c0_i32 = arith.constant 0 : i32
    %c0_i32_0 = arith.constant 0 : i32
    return %arg0, %c0_i32 : i32, i32
  }
}

</mosaic_0001>

<llo_original>
// kernel: tpu_custom_call.1
$region0: #{tpu_custom_call.1}
  #allocation0 [shape = 'u32[]', space=smem, size = 0x4, offset = 0x4, fixed_abs, tag = 'smem constant byte address 0x4 - core index']
  #allocation1 [shape = 'u32[144,128]{1,0:T(1,128)}', space=vmem, size = 0x12000, scoped, tag = 'internal scratch']
  %s0 = inlined_call_operand.hbm [shape: f32[16,128], index: 0, kind: input, shape index: {}]
  %s1 = inlined_call_operand.hbm [shape: f32[16,128], index: 1, kind: input, shape index: {}]
  %s2 = inlined_call_operand.hbm [shape: f32[16,128], index: 2, kind: output, shape index: {}]
  %s3 = sld [smem:[#allocation0]]
  $region61: #{tpu_custom_call.1} parent=0
    _
  %s5 = ssub.s32 1, %s3
  %s6 = scalar_select 0, %s5, %s3
  $region1: #{tpu_custom_call.1} parent=0
    #allocation2 [shape = 'u8[16384]{0}', space=vmem, size = 0x4000, scoped, tag = 'input window, operand 0']
    #allocation3 [shape = 's32[2]{0}', space=sflag, size = 0x8, scoped, tag = 'scoped memory for tpu_custom_call.1']
    #allocation4 [shape = 's32[2]{0}', space=sflag, size = 0x8, scoped, tag = 'scoped memory for tpu_custom_call.1']
    #allocation5 [shape = 'u8[16384]{0}', space=vmem, size = 0x4000, scoped, tag = 'input window, operand 1']
    #allocation6 [shape = 's32[2]{0}', space=sflag, size = 0x8, scoped, tag = 'scoped memory for tpu_custom_call.1']
    #allocation7 [shape = 'u8[8192]{0}', space=vmem, size = 0x2000, scoped, tag = 'output window, operand 0']
    %7 = vsyncpa [#allocation3], 0
    %s8 = scalar_lea.sflag [#allocation3], 1
    %9 = vsyncpa %s8, 0
    %10 = vsyncpa [#allocation6], 0
    %s11 = scalar_lea.sflag [#allocation6], 1
    %12 = vsyncpa %s11, 0
    %13 = vsyncpa [#allocation4], 0
    %s14 = scalar_lea.sflag [#allocation4], 1
    %15 = vsyncpa %s14, 0
    loop: start=0, step=1, limit=4
    $region2: #{tpu_custom_call.1} parent=1 // loop_pre_header
      _
    $region3: #{tpu_custom_call.1} parent=1 // loop_header
      %s17 = sphi 0, %s21
      %p18 = scmp.ge.s32.totalorder %s17, 4
      %s24 = sphi 0, %s36
      %s25 = sphi 0, %s32
      %s26 = sphi 0, %s24
      %s27 = sphi 0, %s25
      %s28 = sphi 0, %s26
      %s29 = sphi 0, %s27
      %s45 = sphi 0, %s47
      %s48 = sphi 0, %s45
      %s49 = sphi 0, %s48
      %s65 = sphi 0, %s49
      %s77 = sphi 0, %s79
      %s80 = sphi 0, %s77
      %s81 = sphi 0, %s80
      %s97 = sphi 0, %s81
      %s103 = sphi 0, %s105
      %s106 = sphi 0, %s103
      %s107 = sphi 0, %s106
      %s123 = sphi 0, %s107
    $region4: #{tpu_custom_call.1} parent=1 // loop_header_branch
      %20 = sbr.rel (%p18) target = $region8
    $region5: #{tpu_custom_call.1} parent=1 // loop_body
      %s22 = ssub.s32 %s17, 1
      %s23 = ssub.s32 %s17, 2
      %s30 = sadd.s32 1, %s25
      %p31 = scmp.ge.s32.totalorder %s30, 1
      %s32 = scalar_select %p31, 0, %s30
      %s33 = sadd.s32 1, %s24
      %s34 = scalar_select %p31, %s33, %s24
      %p35 = scmp.ge.s32.totalorder %s34, 2
      %s36 = scalar_select %p35, 0, %s34
      %s37 = sadd.s32 %s24, %s25
      %p38 = scmp.lt.s32.totalorder %s37, 0
      %s39 = scalar_select %p38, %s37, 0
      %s40 = sadd.s32 %s36, %s32
      %p41 = scmp.lt.s32.totalorder %s40, 0
      %s42 = scalar_select %p41, %s40, 0
      %s43 = ssub.s32 %s39, %s42
      %p44 = scmp.eq.s32.totalorder %s43, 0
      %s46 = sadd.s32 %s45, 1
      %s47 = scalar_select %p44, %s45, %s46
      %p50 = pneg %p44
      %p51 = scmp.eq.s32.totalorder %s17, 1
      %p52 = por %p50, %p51
      %p53 = scmp.ne.s32.totalorder %s45, %s48
      %p54 = scmp.eq.s32.totalorder %s17, 0
      %p55 = por %p53, %p54
      %p56 = scmp.ne.s32.totalorder %s45, %s48
      %p57 = scmp.eq.s32.totalorder %s22, 1
      %p58 = por %p56, %p57
      %p59 = scmp.ne.s32.totalorder %s48, %s49
      %p60 = scmp.eq.s32.totalorder %s22, 0
      %p61 = por %p59, %p60
      %p62 = scmp.ne.s32.totalorder %s48, %s49
      %p63 = scmp.eq.s32.totalorder %s23, 1
      %p64 = por %p62, %p63
      %p66 = scmp.ne.s32.totalorder %s49, %s65
      %p67 = scmp.eq.s32.totalorder %s23, 0
      %p68 = por %p66, %p67
      %s69 = sadd.s32 %s24, %s25
      %p70 = scmp.lt.s32.totalorder %s69, 0
      %s71 = scalar_select %p70, %s69, 0
      %s72 = sadd.s32 %s36, %s32
      %p73 = scmp.lt.s32.totalorder %s72, 0
      %s74 = scalar_select %p73, %s72, 0
      %s75 = ssub.s32 %s71, %s74
      %p76 = scmp.eq.s32.totalorder %s75, 0
      %s78 = sadd.s32 %s77, 1
      %s79 = scalar_select %p76, %s77, %s78
      %p82 = pneg %p76
      %p83 = scmp.eq.s32.totalorder %s17, 1
      %p84 = por %p82, %p83
      %p85 = scmp.ne.s32.totalorder %s77, %s80
      %p86 = scmp.eq.s32.totalorder %s17, 0
      %p87 = por %p85, %p86
      %p88 = scmp.ne.s32.totalorder %s77, %s80
      %p89 = scmp.eq.s32.totalorder %s22, 1
      %p90 = por %p88, %p89
      %p91 = scmp.ne.s32.totalorder %s80, %s81
      %p92 = scmp.eq.s32.totalorder %s22, 0
      %p93 = por %p91, %p92
      %p94 = scmp.ne.s32.totalorder %s80, %s81
      %p95 = scmp.eq.s32.totalorder %s23, 1
      %p96 = por %p94, %p95
      %p98 = scmp.ne.s32.totalorder %s81, %s97
      %p99 = scmp.eq.s32.totalorder %s23, 0
      %p100 = por %p98, %p99
      %s101 = ssub.s32 %s24, %s36
      %p102 = scmp.eq.s32.totalorder %s101, 0
      %s104 = sadd.s32 %s103, 1
      %s105 = scalar_select %p102, %s103, %s104
      %p108 = pneg %p102
      %p109 = scmp.eq.s32.totalorder %s17, 1
      %p110 = por %p108, %p109
      %p111 = scmp.ne.s32.totalorder %s103, %s106
      %p112 = scmp.eq.s32.totalorder %s17, 0
      %p113 = por %p111, %p112
      %p114 = scmp.ne.s32.totalorder %s103, %s106
      %p115 = scmp.eq.s32.totalorder %s22, 1
      %p116 = por %p114, %p115
      %p117 = scmp.ne.s32.totalorder %s106, %s107
      %p118 = scmp.eq.s32.totalorder %s22, 0
      %p119 = por %p117, %p118
      %p120 = scmp.ne.s32.totalorder %s106, %s107
      %p121 = scmp.eq.s32.totalorder %s23, 1
      %p122 = por %p120, %p121
      %p124 = scmp.ne.s32.totalorder %s107, %s123
      %p125 = scmp.eq.s32.totalorder %s23, 0
      %p126 = por %p124, %p125
      %p127 = scmp.le.s32.totalorder 1, %s17
      %p128 = scmp.lt.s32.totalorder %s17, 3
      %p129 = pnand %p127, %p128
      %p130 = pneg %p129
      // Predicated region
      $region9: #{tpu_custom_call.1} parent=5 // pred_check
        _
      $region10: #{tpu_custom_call.1} parent=5 // pred_check_branch
        %132 = sbr.rel (%p129) target = $region12
      $region11: #{tpu_custom_call.1} parent=5 // pred_region
        %s133 = ssub.s32 %s17, 1
      $region12: #{tpu_custom_call.1} parent=5 // pred_fallthru
        _
      %p134 = scmp.lt.s32.totalorder %s17, 2
      // Predicated region
      $region13: #{tpu_custom_call.1} parent=5 // pred_check
        %p135 = pneg %p134
      $region14: #{tpu_custom_call.1} parent=5 // pred_check_branch
        %137 = sbr.rel (%p135) target = $region16
      $region15: #{tpu_custom_call.1} parent=5 // pred_region
        // Predicated region
        $region17: #{tpu_custom_call.1} parent=15 // pred_check
          %p138 = pneg %p55
        $region18: #{tpu_custom_call.1} parent=15 // pred_check_branch
          %140 = sbr.rel (%p138) target = $region20
        $region19: #{tpu_custom_call.1} parent=15 // pred_region
          %s141 = sand.u32 %s45, 1
          %s142 = scalar_lea.sflag [#allocation3], %s141
          %s143 = sand.u32 %s45, 1
          %s144 = smul.addr %s143, 16
          %s145 = scalar_lea.vmem [#allocation2], %s144
          %s146 = sadd.s32 %s24, %s25
          %p147 = scmp.lt.s32.totalorder %s146, 0
          %s148 = scalar_select %p147, %s146, 0
          %s149 = smul.u32 2, %s148
          %s151 = ssub.s32 256, 256
          %152 = vsyncadd %s142, %s151
          %s153 = smul.addr %s149, 128
          %s154 = scalar_lea.hbm %s0, %s153
          %s155 = sshll.u32 %s145, 4
          %s156 = int_to_ptr.vmem [resolvable:$true] %s155
          %161 = dma.hbm_to_vmem [thread:$0]  %s154, 256, %s156, %s142, 128, 128, 8
        $region20: #{tpu_custom_call.1} parent=15 // pred_fallthru
          _
        // Predicated region
        $region21: #{tpu_custom_call.1} parent=15 // pred_check
          %p162 = pneg %p87
        $region22: #{tpu_custom_call.1} parent=15 // pred_check_branch
          %164 = sbr.rel (%p162) target = $region24
        $region23: #{tpu_custom_call.1} parent=15 // pred_region
          %s165 = sand.u32 %s77, 1
          %s166 = scalar_lea.sflag [#allocation6], %s165
          %s167 = sand.u32 %s77, 1
          %s168 = smul.addr %s167, 16
          %s169 = scalar_lea.vmem [#allocation5], %s168
          %s170 = sadd.s32 %s24, %s25
          %p171 = scmp.lt.s32.totalorder %s170, 0
          %s172 = scalar_select %p171, %s170, 0
          %s173 = smul.u32 2, %s172
          %s175 = ssub.s32 256, 256
          %176 = vsyncadd %s166, %s175
          %s177 = smul.addr %s173, 128
          %s178 = scalar_lea.hbm %s1, %s177
          %s179 = sshll.u32 %s169, 4
          %s180 = int_to_ptr.vmem [resolvable:$true] %s179
          %185 = dma.hbm_to_vmem [thread:$0]  %s178, 256, %s180, %s166, 128, 128, 8
        $region24: #{tpu_custom_call.1} parent=15 // pred_fallthru
          _
      $region16: #{tpu_custom_call.1} parent=5 // pred_fallthru
        _
      %p186 = scmp.le.s32.totalorder 1, %s17
      %p187 = scmp.lt.s32.totalorder %s17, 3
      %p188 = pnand %p186, %p187
      %p189 = pneg %p188
      // Predicated region
      $region25: #{tpu_custom_call.1} parent=5 // pred_check
        _
      $region26: #{tpu_custom_call.1} parent=5 // pred_check_branch
        %191 = sbr.rel (%p188) target = $region28
      $region27: #{tpu_custom_call.1} parent=5 // pred_region
        %s192 = ssub.s32 %s17, 1
        %s193 = sand.u32 %s48, 1
        %s194 = scalar_lea.sflag [#allocation3], %s193
        %s195 = sand.u32 %s48, 1
        %s196 = smul.addr %s195, 16
        %s197 = scalar_lea.vmem [#allocation2], %s196
        // Predicated region
        $region29: #{tpu_custom_call.1} parent=27 // pred_check
          %p198 = pneg %p61
        $region30: #{tpu_custom_call.1} parent=27 // pred_check_branch
          %200 = sbr.rel (%p198) target = $region32
        $region31: #{tpu_custom_call.1} parent=27 // pred_region
          %201 = dma.done %s194, 256
        $region32: #{tpu_custom_call.1} parent=27 // pred_fallthru
          _
        %s202 = sand.u32 %s80, 1
        %s203 = scalar_lea.sflag [#allocation6], %s202
        %s204 = sand.u32 %s80, 1
        %s205 = smul.addr %s204, 16
        %s206 = scalar_lea.vmem [#allocation5], %s205
        // Predicated region
        $region33: #{tpu_custom_call.1} parent=27 // pred_check
          %p207 = pneg %p93
        $region34: #{tpu_custom_call.1} parent=27 // pred_check_branch
          %209 = sbr.rel (%p207) target = $region36
        $region35: #{tpu_custom_call.1} parent=27 // pred_region
          %210 = dma.done %s203, 256
        $region36: #{tpu_custom_call.1} parent=27 // pred_fallthru
          _
        %s211 = sand.u32 %s48, 1
        %s212 = scalar_lea.sflag [#allocation3], %s211
        %s213 = sand.u32 %s48, 1
        %s214 = smul.addr %s213, 16
        %s215 = scalar_lea.vmem [#allocation2], %s214
        %p216 = pneg %p61
        %p217 = pneg %p58
        %s218 = sand.u32 %s80, 1
        %s219 = scalar_lea.sflag [#allocation6], %s218
        %s220 = sand.u32 %s80, 1
        %s221 = smul.addr %s220, 16
        %s222 = scalar_lea.vmem [#allocation5], %s221
        %p223 = pneg %p93
        %p224 = pneg %p90
        %p225 = pneg %p119
        %p226 = pneg %p116
        %s227 = sand.u32 %s106, 1
        %s228 = scalar_lea.sflag [#allocation4], %s227
        %s229 = sand.u32 %s106, 1
        %s230 = smul.addr %s229, 8
        %s231 = scalar_lea.vmem [#allocation7], %s230
        %s232 = sadd.s32 %s26, %s27
        %p233 = scmp.lt.s32.totalorder %s232, 0
        %s234 = scalar_select %p233, %s232, 0
        %s235 = smul.u32 2, %s234
        %s236 = sadd.s32 %s26, %s27
        %p237 = scmp.lt.s32.totalorder %s236, 0
        %s238 = scalar_select %p237, %s236, 0
        %s239 = smul.u32 2, %s238
        %s240 = sadd.s32 %s26, %s27
        %p241 = scmp.eq.s32.totalorder %s27, 0
        // Predicated region
        $region37: #{tpu_custom_call.1} parent=27 // pred_check
          %p242 = pneg %p241
        $region38: #{tpu_custom_call.1} parent=27 // pred_check_branch
          %244 = sbr.rel (%p242) target = $region40
        $region39: #{tpu_custom_call.1} parent=27 // pred_region
          %245 = vst [vmem:[%s231] sm:$0xff] 0.0
        $region40: #{tpu_custom_call.1} parent=27 // pred_fallthru
          _
        %v246 = vld [vmem:[%s197] sm:$0xff]
        %v247 = vld [vmem:[%s197 + $0x8] sm:$0xff]
        %v248 = vld [vmem:[%s206] sm:$0xff]
        %v249 = vld [vmem:[%s206 + $0x8] sm:$0xff]
        %v250 = vmax.f32 %v246, 0.0
        %v251 = vmax.f32 %v247, 0.0
        %v252 = vmul.f32 %v246, %v248
        %v253 = vmul.f32 %v247, %v249
        %v254 = vsub.f32 %v250, %v252
        %v255 = vsub.f32 %v251, %v253
        %v256 = vand.u32 2147483647, %v246
        %v257 = vand.u32 2147483647, %v247
        %v258 = vsub.f32 0.0, %v256
        %v259 = vsub.f32 0.0, %v257
        %v260 = vmul.f32 %v258, 1.442695
        %v261 = vpow.pop %v260
        %v262 = vmul.f32 %v259, 1.442695
        %v263 = vpow.pop %v262
        %v264 = vadd.f32 %v261, 1.0
        %v265 = vlog2.pop %v264
        %v266 = vmul.f32 %v265, 0.6931472
        %v267 = vmul.f32 -0.5, %v261
        %v268 = vadd.f32 %v267, 1.0
        %v269 = vmul.f32 %v268, %v261
        %v270 = vand.u32 2147483647, %v261
        %vm271 = vcmp.lt.f32.partialorder %v270, 0.0004427343
        %v272 = vsel %vm271, %v269, %v266
        %v273 = vadd.f32 %v263, 1.0
        %v274 = vlog2.pop %v273
        %v275 = vmul.f32 %v274, 0.6931472
        %v276 = vmul.f32 -0.5, %v263
        %v277 = vadd.f32 %v276, 1.0
        %v278 = vmul.f32 %v277, %v263
        %v279 = vand.u32 2147483647, %v263
        %vm280 = vcmp.lt.f32.partialorder %v279, 0.0004427343
        %v281 = vsel %vm280, %v278, %v275
        %v282 = vadd.f32 %v254, %v272
        %v283 = vadd.f32 %v255, %v281
        %p284 = scmp.lt.s32.totalorder %s240, 0
        // Predicated region
        $region41: #{tpu_custom_call.1} parent=27 // pred_check
          %p285 = pneg %p284
        $region42: #{tpu_custom_call.1} parent=27 // pred_check_branch
          %287 = sbr.rel (%p285) target = $region44
        $region43: #{tpu_custom_call.1} parent=27 // pred_region
          %v288 = vld [vmem:[%s231] sm:$0xff]
          %v289 = vadd.f32 %v282, %v283
          %v290 = vadd.f32 %v288, %v289
          %291 = vst [vmem:[%s231] sm:$0xff] %v290
        $region44: #{tpu_custom_call.1} parent=27 // pred_fallthru
          _
        %p292 = scmp.ge.s32.totalorder %s240, 0
        // Predicated region
        $region45: #{tpu_custom_call.1} parent=27 // pred_check
          %p293 = pneg %p292
        $region46: #{tpu_custom_call.1} parent=27 // pred_check_branch
          %295 = sbr.rel (%p293) target = $region48
        $region47: #{tpu_custom_call.1} parent=27 // pred_region
          %s296 = smul.u32 %s240, 16
          %v297 = vlaneseq
          %v298 = vshrl.u32 %v297, 7
          %v299 = vadd.s32 %v298, 8
          %v300 = vstv %s296
          %v301 = vadd.s32 %v300, %v298
          %v302 = vadd.s32 %v300, %v299
          %v303 = vld [vmem:[%s231] sm:$0xff]
          %vm304 = vcmp.lt.s32.totalorder %v301, 16
          %vm305 = vcmp.lt.s32.totalorder %v302, 16
          %v306 = vsel %vm304, %v282, 0.0
          %v307 = vsel %vm305, %v283, 0.0
          %v308 = vadd.f32 %v306, %v307
          %v309 = vadd.f32 %v303, %v308
          %310 = vst [vmem:[%s231] sm:$0xff] %v309
        $region48: #{tpu_custom_call.1} parent=27 // pred_fallthru
          _
        %s311 = sand.u32 %s106, 1
        %s312 = scalar_lea.sflag [#allocation4], %s311
        %s313 = sand.u32 %s106, 1
        %s314 = smul.addr %s313, 8
        %s315 = scalar_lea.vmem [#allocation7], %s314
        // Predicated region
        $region49: #{tpu_custom_call.1} parent=27 // pred_check
          %p316 = pneg %p116
        $region50: #{tpu_custom_call.1} parent=27 // pred_check_branch
          %318 = sbr.rel (%p316) target = $region52
        $region51: #{tpu_custom_call.1} parent=27 // pred_region
          %s320 = ssub.s32 128, 128
          %321 = vsyncadd %s312, %s320
          %s322 = smul.addr %s26, 128
          %s323 = scalar_lea.hbm %s2, %s322
          %s325 = sshll.u32 %s315, 4
          %s326 = int_to_ptr.vmem [resolvable:$true] %s325
          %328 = dma.vmem_to_hbm [thread:$0]  %s326, 128, %s323, %s312
        $region52: #{tpu_custom_call.1} parent=27 // pred_fallthru
          _
      $region28: #{tpu_custom_call.1} parent=5 // pred_fallthru
        _
      %p329 = scmp.le.s32.totalorder 2, %s17
      // Predicated region
      $region53: #{tpu_custom_call.1} parent=5 // pred_check
        %p330 = pneg %p329
      $region54: #{tpu_custom_call.1} parent=5 // pred_check_branch
        %332 = sbr.rel (%p330) target = $region56
      $region55: #{tpu_custom_call.1} parent=5 // pred_region
        %s333 = ssub.s32 %s17, 2
        // Predicated region
        $region57: #{tpu_custom_call.1} parent=55 // pred_check
          %p334 = pneg %p122
        $region58: #{tpu_custom_call.1} parent=55 // pred_check_branch
          %336 = sbr.rel (%p334) target = $region60
        $region59: #{tpu_custom_call.1} parent=55 // pred_region
          %s337 = sand.u32 %s107, 1
          %s338 = scalar_lea.sflag [#allocation4], %s337
          %s339 = sand.u32 %s107, 1
          %s340 = smul.addr %s339, 8
          %s341 = scalar_lea.vmem [#allocation7], %s340
          %342 = dma.done %s338, 128
        $region60: #{tpu_custom_call.1} parent=55 // pred_fallthru
          _
      $region56: #{tpu_custom_call.1} parent=5 // pred_fallthru
        _
    $region6: #{tpu_custom_call.1} parent=1 // loop_footer
      %s21 = sadd.s32 1, %s17
    $region7: #{tpu_custom_call.1} parent=1 // loop_footer_branch
      %16 = sbr.rel target = $region3
    $region8: #{tpu_custom_call.1} parent=1 // loop_exit
      _
    %343 = vsyncpa [#allocation3], 1
    %s344 = scalar_lea.sflag [#allocation3], 1
    %345 = vsyncpa %s344, 1
    %346 = vsyncpa [#allocation6], 1
    %s347 = scalar_lea.sflag [#allocation6], 1
    %348 = vsyncpa %s347, 1
    %349 = vsyncpa [#allocation4], 1
    %s350 = scalar_lea.sflag [#allocation4], 1
    %351 = vsyncpa %s350, 1

</llo_original>
